<compile_context>
chip_gen: v7x
topology: tpu7x:2x2x1
jax: 0.10.0
libtpu: 0.0.40
codegen_flags: <defaults>
</compile_context>

<pallas_src>
import math

import jax
import jax.numpy as jnp
from jax import lax
from jax.experimental import pallas as pl
from jax.experimental.pallas import tpu as pltpu


ROW_BLOCK_TARGET = 512   # physical (packed) rows per grid step
LANES = 128


def _round_up(x, m):
    return ((x + m - 1) // m) * m


def _gmm_prior_kernel(mu_ref, std_ref, seg_ref, eps_ref, o_ref):
    # mu/std/eps/o: [r_blk, W] lane-dense tiles; seg: [W, W] block-diagonal ones.
    samples = mu_ref[...] + eps_ref[...] * std_ref[...]          # VPU elementwise
    sq = samples * samples

    # Segmented sum of squares over each logical row's D lanes, broadcast back
    # to every lane of its segment, as a single MXU matmul (keeps the whole
    # block 128-lane dense; no cross-lane reshape / relayout).
    sq_sum = jnp.dot(sq, seg_ref[...], preferred_element_type=jnp.float32)

    # F.normalize(p=2): x / max(||x||, 1e-12)  ==  x * rsqrt(max(||x||^2, 1e-24))
    inv = lax.rsqrt(jnp.maximum(sq_sum, jnp.float32(1e-24)))     # EUP slot
    o_ref[...] = samples * inv


def gmm_prior_forward(z, mu, logvar, key, *, row_block_target=ROW_BLOCK_TARGET):
    """Pallas equivalent of GMMPrior.forward(z)."""
    num_sample = int(z.shape[0])
    K, D = mu.shape
    n = num_sample // K + 1                         # int(num_sample / K) + 1

    # sampling_gmm: n independent eps draws, concatenated, truncated to N rows
    # (identical draw to the pure-JAX reference -> bit-exact comparison).
    eps = jax.random.normal(key, (n * K, D), dtype=jnp.float32)[:num_sample]

    # exp() hoisted off the per-row path: computed once on the [K, D] params.
    mu = mu.astype(jnp.float32)
    std = jnp.exp(0.5 * logvar.astype(jnp.float32))

    # ---- lane-dense packing: `pack` logical rows per 128-lane physical row.
    if D < LANES and LANES % D == 0:
        pack = LANES // D
    else:
        pack = 1   # TODO(synk): pad D up to a multiple of 128 for odd feature sizes
    W = pack * D

    # Component of logical row r is (r % K); the packed per-physical-row pattern
    # repeats every T physical rows, so row blocks are a multiple of lcm(8, T)
    # and the same resident parameter slab is valid for every grid step.
    T = K // math.gcd(K, pack)
    unit = (8 * T) // math.gcd(8, T)                # lcm(8, T)
    r_phys = pl.cdiv(num_sample, pack)              # physical rows actually needed
    r_blk = min(_round_up(row_block_target, unit), _round_up(r_phys, unit))
    r_pad = _round_up(r_phys, r_blk)
    grid = (r_pad // r_blk,)

    # Resident operands (constant index_map -> fetched once, stay in VMEM):
    comps = jnp.arange(r_blk * pack, dtype=jnp.int32) % K
    mu_block = mu[comps].reshape(r_blk, W)          # packed mu pattern per block
    std_block = std[comps].reshape(r_blk, W)        # packed std pattern per block
    group = jnp.arange(W, dtype=jnp.int32) // D
    seg = (group[:, None] == group[None, :]).astype(jnp.float32)   # [W, W]

    # Streamed operand: eps, padded to full blocks then packed (contiguous,
    # free reshape).  Padded rows produce garbage-but-finite output and are
    # sliced off afterwards.
    eps_packed = jnp.pad(
        eps, ((0, r_pad * pack - num_sample), (0, 0))
    ).reshape(r_pad, W)

    mu_spec = pl.BlockSpec((r_blk, W), lambda i: (0, 0))
    std_spec = pl.BlockSpec((r_blk, W), lambda i: (0, 0))
    seg_spec = pl.BlockSpec((W, W), lambda i: (0, 0))
    eps_spec = pl.BlockSpec((r_blk, W), lambda i: (i, 0))
    out_spec = pl.BlockSpec((r_blk, W), lambda i: (i, 0))

    out_packed = pl.pallas_call(
        _gmm_prior_kernel,
        out_shape=jax.ShapeDtypeStruct((r_pad, W), jnp.float32),
        grid_spec=pl.GridSpec(
            grid=grid,
            in_specs=[mu_spec, std_spec, seg_spec, eps_spec],
            out_specs=out_spec,
        ),
        # VMEM budget: double-buffered eps + out (2 * 2 * r_blk*W*4B) plus the
        # resident mu/std/seg slabs ~= 2-3 MiB at r_blk=512, W=128 -- well under
        # v5e's 16 MiB and v7x's 32 MiB scoped defaults, so no vmem_limit_bytes
        # override is required.  "parallel" lets v7x shard row blocks over both
        # TensorCores when the grid has >= 2 steps.
        compiler_params=pltpu.CompilerParams(
            dimension_semantics=("parallel",),
        ),
    )(mu_block, std_block, seg, eps_packed)

    # Unpack (contiguous reshape) and drop the padded tail rows.
    return out_packed.reshape(r_pad * pack, D)[:num_sample]


def gmm_prior_reference(z, mu, logvar, key):
    """Pure-JAX reference for correctness checking (matches the torch module)."""
    num_sample = z.shape[0]
    K, D = mu.shape
    n = num_sample // K + 1
    eps = jax.random.normal(key, (n * K, D), dtype=jnp.float32)[:num_sample]
    std = jnp.exp(0.5 * logvar)
    mu_t = jnp.tile(mu, (n, 1))[:num_sample]
    std_t = jnp.tile(std, (n, 1))[:num_sample]
    samples = mu_t + eps * std_t
    norm = jnp.sqrt(jnp.sum(samples * samples, axis=-1, keepdims=True))
    return samples / jnp.maximum(norm, 1e-12)


if __name__ == "__main__":
    key = jax.random.PRNGKey(0)
    k_mu, k_lv, k_z, k_eps = jax.random.split(key, 4)

    # data_size = [number_components, output_size]
    K, D = 4, 32
    num_sample = 16

    mu = jax.random.normal(k_mu, (K, D), dtype=jnp.float32)
    logvar = jax.random.normal(k_lv, (K, D), dtype=jnp.float32)
    z = jax.random.normal(k_z, (num_sample, D), dtype=jnp.float32)

    out = jax.block_until_ready(gmm_prior_forward(z, mu, logvar, k_eps))
    ref = gmm_prior_reference(z, mu, logvar, k_eps)

    assert out.shape == (num_sample, D)
    # The in-kernel segmented L2 reduce runs on the MXU (bf16 multiplier
    # passes), so allow ~1e-3-level rounding vs the pure-f32 reference.
    assert jnp.allclose(out, ref, atol=2e-3, rtol=2e-3), "mismatch vs reference"
    # rows should be unit-norm
    assert jnp.allclose(jnp.linalg.norm(out, axis=-1), 1.0, atol=2e-3)

    print("KERNEL_OK")
</pallas_src>

<mosaic_0001>
module attributes {stable_mosaic.version = 11 : i64} {
  func.func @_gmm_prior_kernel(%arg0: i32, %arg1: memref<8x128xf32, #tpu.memory_space<vmem>>, %arg2: memref<8x128xf32, #tpu.memory_space<vmem>>, %arg3: memref<128x128xf32, #tpu.memory_space<vmem>>, %arg4: memref<8x128xf32, #tpu.memory_space<vmem>>, %arg5: memref<8x128xf32, #tpu.memory_space<vmem>>) attributes {dimension_semantics = [#tpu.dimension_semantics<parallel>], iteration_bounds = array<i64: 1>, scalar_prefetch = 0 : i64, scratch_operands = 0 : i64, tpu.core_type = #tpu.core_type<tc>, window_params = [{pipeline_mode = #tpu.pipeline_mode<synchronous>, transform_indices = @transform_0, window_bounds = array<i64: 8, 128>}, {pipeline_mode = #tpu.pipeline_mode<synchronous>, transform_indices = @transform_1, window_bounds = array<i64: 8, 128>}, {pipeline_mode = #tpu.pipeline_mode<synchronous>, transform_indices = @transform_2, window_bounds = array<i64: 128, 128>}, {transform_indices = @transform_3, window_bounds = array<i64: 8, 128>}, {transform_indices = @transform_4, window_bounds = array<i64: 8, 128>}]} {
    %c0 = arith.constant 0 : index
    %c0_0 = arith.constant 0 : index
    %0 = vector.load %arg1[%c0, %c0_0] : memref<8x128xf32, #tpu.memory_space<vmem>>, vector<8x128xf32>
    %c0_1 = arith.constant 0 : index
    %c0_2 = arith.constant 0 : index
    %1 = vector.load %arg4[%c0_1, %c0_2] : memref<8x128xf32, #tpu.memory_space<vmem>>, vector<8x128xf32>
    %c0_3 = arith.constant 0 : index
    %c0_4 = arith.constant 0 : index
    %2 = vector.load %arg2[%c0_3, %c0_4] : memref<8x128xf32, #tpu.memory_space<vmem>>, vector<8x128xf32>
    %3 = arith.mulf %1, %2 : vector<8x128xf32>
    %4 = arith.addf %0, %3 : vector<8x128xf32>
    %5 = arith.mulf %4, %4 : vector<8x128xf32>
    %c0_5 = arith.constant 0 : index
    %c0_6 = arith.constant 0 : index
    %6 = vector.load %arg3[%c0_5, %c0_6] : memref<128x128xf32, #tpu.memory_space<vmem>>, vector<128x128xf32>
    %cst = arith.constant dense<0.000000e+00> : vector<8x128xf32>
    %7 = tpu.matmul %5, %6, %cst {dimension_numbers = #tpu.dot_dimension_numbers<[1], [0], [0], [1], [0, 0, 1, 1], [], []>} : vector<8x128xf32>, vector<128x128xf32>, vector<8x128xf32> -> vector<8x128xf32>
    %cst_7 = arith.constant 1.000000e-24 : f32
    %8 = vector.broadcast %cst_7 : f32 to vector<8x128xf32>
    %9 = arith.maximumf %7, %8 : vector<8x128xf32>
    %10 = math.rsqrt %9 : vector<8x128xf32>
    %11 = arith.mulf %4, %10 : vector<8x128xf32>
    %c0_8 = arith.constant 0 : index
    %c0_9 = arith.constant 0 : index
    %12 = vector.load %arg5[%c0_8, %c0_9] : memref<8x128xf32, #tpu.memory_space<vmem>>, vector<8x128xf32>
    tpu.vector_store %arg5[%c0_8, %c0_9], %11 {strides = array<i32>} : memref<8x128xf32, #tpu.memory_space<vmem>>, vector<8x128xf32>,
    return
  }
  func.func @transform_0(%arg0: i32) -> (i32, i32) {
    %c0_i32 = arith.constant 0 : i32
    %c0_i32_0 = arith.constant 0 : i32
    %c0_i32_1 = arith.constant 0 : i32
    return %c0_i32, %c0_i32_0 : i32, i32
  }
  func.func @transform_1(%arg0: i32) -> (i32, i32) {
    %c0_i32 = arith.constant 0 : i32
    %c0_i32_0 = arith.constant 0 : i32
    %c0_i32_1 = arith.constant 0 : i32
    return %c0_i32, %c0_i32_0 : i32, i32
  }
  func.func @transform_2(%arg0: i32) -> (i32, i32) {
    %c0_i32 = arith.constant 0 : i32
    %c0_i32_0 = arith.constant 0 : i32
    %c0_i32_1 = arith.constant 0 : i32
    return %c0_i32, %c0_i32_0 : i32, i32
  }
  func.func @transform_3(%arg0: i32) -> (i32, i32) {
    %c0_i32 = arith.constant 0 : i32
    %c0_i32_0 = arith.constant 0 : i32
    return %arg0, %c0_i32 : i32, i32
  }
  func.func @transform_4(%arg0: i32) -> (i32, i32) {
    %c0_i32 = arith.constant 0 : i32
    %c0_i32_0 = arith.constant 0 : i32
    return %arg0, %c0_i32 : i32, i32
  }
}

</mosaic_0001>

<llo_original>
// kernel: tpu_custom_call.1
$region0: #{tpu_custom_call.1}
  #allocation0 [shape = 'u32[]', space=smem, size = 0x4, offset = 0x4, fixed_abs, tag = 'smem constant byte address 0x4 - core index']
  #allocation1 [shape = 'u32[144,128]{1,0:T(1,128)}', space=vmem, size = 0x12000, scoped, tag = 'internal scratch']
  %s0 = inlined_call_operand.hbm [shape: f32[8,128], index: 0, kind: input, shape index: {}]
  %s1 = inlined_call_operand.hbm [shape: f32[8,128], index: 1, kind: input, shape index: {}]
  %s2 = inlined_call_operand.hbm [shape: f32[128,128], index: 2, kind: input, shape index: {}]
  %s3 = inlined_call_operand.vmem [shape: f32[8,128], index: 3, kind: input, shape index: {}]
  %s4 = inlined_call_operand.hbm [shape: f32[8,128], index: 4, kind: output, shape index: {}]
  %s5 = sld [smem:[#allocation0]]
  $region38: #{tpu_custom_call.1} parent=0
    _
  %s7 = ssub.s32 1, %s5
  %s8 = scalar_select 0, %s7, %s5
  $region1: #{tpu_custom_call.1} parent=0
    #allocation2 [shape = 'u8[4096]{0}', space=vmem, size = 0x1000, scoped, tag = 'input window, operand 0, single buffered']
    #allocation3 [shape = 's32[1]{0}', space=sflag, size = 0x4, scoped, tag = 'scoped memory for tpu_custom_call.1']
    #allocation4 [shape = 's32[1]{0}', space=sflag, size = 0x4, scoped, tag = 'scoped memory for tpu_custom_call.1']
    #allocation5 [shape = 'u8[4096]{0}', space=vmem, size = 0x1000, scoped, tag = 'input window, operand 1, single buffered']
    #allocation6 [shape = 's32[1]{0}', space=sflag, size = 0x4, scoped, tag = 'scoped memory for tpu_custom_call.1']
    #allocation7 [shape = 'u8[65536]{0}', space=vmem, size = 0x10000, scoped, tag = 'input window, operand 2, single buffered']
    #allocation8 [shape = 'u8[4096]{0}', space=vmem, size = 0x1000, scoped, tag = 'output window, operand 0, single buffered']
    %9 = vsyncpa [#allocation3], 0
    %10 = vsyncpa [#allocation6], 0
    %11 = vsyncpa [#allocation4], 0
    // Predicated region
    $region2: #{tpu_custom_call.1} parent=1 // pred_check
      _
    $region3: #{tpu_custom_call.1} parent=1 // pred_check_branch
      %13 = sbr.rel (0) target = $region5
    $region4: #{tpu_custom_call.1} parent=1 // pred_region
      %s15 = ssub.s32 128, 128
      %16 = vsyncadd [#allocation3], %s15
      %s18 = sshll.u32 [#allocation2], 4
      %s19 = int_to_ptr.vmem [resolvable:$true] %s18
      %21 = dma.hbm_to_vmem [thread:$0]  %s0, 128, %s19, [#allocation3]
    $region5: #{tpu_custom_call.1} parent=1 // pred_fallthru
      _
    // Predicated region
    $region6: #{tpu_custom_call.1} parent=1 // pred_check
      _
    $region7: #{tpu_custom_call.1} parent=1 // pred_check_branch
      %23 = sbr.rel (0) target = $region9
    $region8: #{tpu_custom_call.1} parent=1 // pred_region
      %s25 = ssub.s32 128, 128
      %26 = vsyncadd [#allocation6], %s25
      %s28 = sshll.u32 [#allocation5], 4
      %s29 = int_to_ptr.vmem [resolvable:$true] %s28
      %31 = dma.hbm_to_vmem [thread:$0]  %s1, 128, %s29, [#allocation6]
    $region9: #{tpu_custom_call.1} parent=1 // pred_fallthru
      _
    // Predicated region
    $region10: #{tpu_custom_call.1} parent=1 // pred_check
      _
    $region11: #{tpu_custom_call.1} parent=1 // pred_check_branch
      %33 = sbr.rel (0) target = $region13
    $region12: #{tpu_custom_call.1} parent=1 // pred_region
      %s35 = ssub.s32 2048, 2048
      %36 = vsyncadd [#allocation6], %s35
      %s37 = sshll.u32 [#allocation7], 4
      %s38 = int_to_ptr.vmem [resolvable:$true] %s37
      %43 = dma.hbm_to_vmem [thread:$0]  %s2, 2048, %s38, [#allocation6], 128, 128, 8
    $region13: #{tpu_custom_call.1} parent=1 // pred_fallthru
      _
    // Predicated region
    $region14: #{tpu_custom_call.1} parent=1 // pred_check
      _
    $region15: #{tpu_custom_call.1} parent=1 // pred_check_branch
      %45 = sbr.rel (0) target = $region17
    $region16: #{tpu_custom_call.1} parent=1 // pred_region
      _
    $region17: #{tpu_custom_call.1} parent=1 // pred_fallthru
      _
    // Predicated region
    $region18: #{tpu_custom_call.1} parent=1 // pred_check
      _
    $region19: #{tpu_custom_call.1} parent=1 // pred_check_branch
      %47 = sbr.rel (0) target = $region21
    $region20: #{tpu_custom_call.1} parent=1 // pred_region
      %48 = dma.done [#allocation3], 128
    $region21: #{tpu_custom_call.1} parent=1 // pred_fallthru
      _
    // Predicated region
    $region22: #{tpu_custom_call.1} parent=1 // pred_check
      _
    $region23: #{tpu_custom_call.1} parent=1 // pred_check_branch
      %50 = sbr.rel (0) target = $region25
    $region24: #{tpu_custom_call.1} parent=1 // pred_region
      %51 = dma.done [#allocation6], 128
    $region25: #{tpu_custom_call.1} parent=1 // pred_fallthru
      _
    // Predicated region
    $region26: #{tpu_custom_call.1} parent=1 // pred_check
      _
    $region27: #{tpu_custom_call.1} parent=1 // pred_check_branch
      %53 = sbr.rel (0) target = $region29
    $region28: #{tpu_custom_call.1} parent=1 // pred_region
      %54 = dma.done [#allocation6], 2048
    $region29: #{tpu_custom_call.1} parent=1 // pred_fallthru
      _
    %v55 = vld [vmem:[#allocation2] sm:$0xff]
    %v56 = vld [vmem:[%s3] sm:$0xff]
    %v57 = vld [vmem:[#allocation5] sm:$0xff]
    %v58 = vmul.f32 %v56, %v57
    %v59 = vadd.f32 %v55, %v58
    %v60 = vmul.f32 %v59, %v59
    %v61 = vld [vmem:[#allocation7] sm:$0xff]
    %v62 = vld [vmem:[#allocation7 + $0x8] sm:$0xff]
    %v63 = vld [vmem:[#allocation7 + $0x10] sm:$0xff]
    %v64 = vld [vmem:[#allocation7 + $0x18] sm:$0xff]
    %v65 = vld [vmem:[#allocation7 + $0x20] sm:$0xff]
    %v66 = vld [vmem:[#allocation7 + $0x28] sm:$0xff]
    %v67 = vld [vmem:[#allocation7 + $0x30] sm:$0xff]
    %v68 = vld [vmem:[#allocation7 + $0x38] sm:$0xff]
    %v69 = vld [vmem:[#allocation7 + $0x40] sm:$0xff]
    %v70 = vld [vmem:[#allocation7 + $0x48] sm:$0xff]
    %v71 = vld [vmem:[#allocation7 + $0x50] sm:$0xff]
    %v72 = vld [vmem:[#allocation7 + $0x58] sm:$0xff]
    %v73 = vld [vmem:[#allocation7 + $0x60] sm:$0xff]
    %v74 = vld [vmem:[#allocation7 + $0x68] sm:$0xff]
    %v75 = vld [vmem:[#allocation7 + $0x70] sm:$0xff]
    %v76 = vld [vmem:[#allocation7 + $0x78] sm:$0xff]
    %77 = vmatprep.subr.mxu0 0.0
    %78 = vmatpush1.msra.mxu0 %v61
    %79 = vmatprep.subr.mxu0 0.0
    %80 = vmatpush1.msra.mxu0 %v62
    %81 = vmatprep.subr.mxu0 0.0
    %82 = vmatpush1.msra.mxu0 %v63
    %83 = vmatprep.subr.mxu0 0.0
    %84 = vmatpush1.msra.mxu0 %v64
    %85 = vmatprep.subr.mxu0 0.0
    %86 = vmatpush1.msra.mxu0 %v65
    %87 = vmatprep.subr.mxu0 0.0
    %88 = vmatpush1.msra.mxu0 %v66
    %89 = vmatprep.subr.mxu0 0.0
    %90 = vmatpush1.msra.mxu0 %v67
    %91 = vmatprep.subr.mxu0 0.0
    %92 = vmatpush1.msra.mxu0 %v68
    %93 = vmatprep.subr.mxu0 0.0
    %94 = vmatpush1.msra.mxu0 %v69
    %95 = vmatprep.subr.mxu0 0.0
    %96 = vmatpush1.msra.mxu0 %v70
    %97 = vmatprep.subr.mxu0 0.0
    %98 = vmatpush1.msra.mxu0 %v71
    %99 = vmatprep.subr.mxu0 0.0
    %100 = vmatpush1.msra.mxu0 %v72
    %101 = vmatprep.subr.mxu0 0.0
    %102 = vmatpush1.msra.mxu0 %v73
    %103 = vmatprep.subr.mxu0 0.0
    %104 = vmatpush1.msra.mxu0 %v74
    %105 = vmatprep.subr.mxu0 0.0
    %106 = vmatpush1.msra.mxu0 %v75
    %107 = vmatprep.subr.mxu0 0.0
    %108 = vmatpush1.msra.mxu0 %v76
    %109 = vmatprep.subr.mxu0 0.0
    %110 = vmatpush1.msra.mxu0 0.0
    %111 = vmatprep.subr.mxu0 0.0
    %112 = vmatpush1.msra.mxu0 0.0
    %113 = vmatprep.subr.mxu0 0.0
    %114 = vmatpush1.msra.mxu0 0.0
    %115 = vmatprep.subr.mxu0 0.0
    %116 = vmatpush1.msra.mxu0 0.0
    %117 = vmatprep.subr.mxu0 0.0
    %118 = vmatpush1.msra.mxu0 0.0
    %119 = vmatprep.subr.mxu0 0.0
    %120 = vmatpush1.msra.mxu0 0.0
    %121 = vmatprep.subr.mxu0 0.0
    %122 = vmatpush1.msra.mxu0 0.0
    %123 = vmatprep.subr.mxu0 0.0
    %124 = vmatpush1.msra.mxu0 0.0
    %125 = vmatprep.subr.mxu0 0.0
    %126 = vmatpush1.msra.mxu0 0.0
    %127 = vmatprep.subr.mxu0 0.0
    %128 = vmatpush1.msra.mxu0 0.0
    %129 = vmatprep.subr.mxu0 0.0
    %130 = vmatpush1.msra.mxu0 0.0
    %131 = vmatprep.subr.mxu0 0.0
    %132 = vmatpush1.msra.mxu0 0.0
    %133 = vmatprep.subr.mxu0 0.0
    %134 = vmatpush1.msra.mxu0 0.0
    %135 = vmatprep.subr.mxu0 0.0
    %136 = vmatpush1.msra.mxu0 0.0
    %137 = vmatprep.subr.mxu0 0.0
    %138 = vmatpush1.msra.mxu0 0.0
    %139 = vmatprep.subr.mxu0 0.0
    %140 = vmatpush1.msra.mxu0 0.0
    %141 = vmatprep.mubr.f32.mxu0 0.0
    %142 = vmatmul.mubr.f32.gmra.mrb[0].mxu0 %v60
    %v143 = vpop.f32.mrb[0].mxu0
    %v144 = vadd.f32 0.0, %v143
    %v145 = vpop.f32.mrb[0].mxu0
    %146 = vdwg.mxu0
    %v147 = vmax.f32 %v144, 1e-24
    %v148 = vrsqrt.pop %v147
    %v149 = vmul.f32 %v59, %v148
    %150 = vst [vmem:[#allocation8] sm:$0xff] %v149
    // Predicated region
    $region30: #{tpu_custom_call.1} parent=1 // pred_check
      _
    $region31: #{tpu_custom_call.1} parent=1 // pred_check_branch
      %152 = sbr.rel (0) target = $region33
    $region32: #{tpu_custom_call.1} parent=1 // pred_region
      %s154 = ssub.s32 128, 128
      %155 = vsyncadd [#allocation4], %s154
      %s157 = sshll.u32 [#allocation8], 4
      %s158 = int_to_ptr.vmem [resolvable:$true] %s157
      %160 = dma.vmem_to_hbm [thread:$0]  %s158, 128, %s4, [#allocation4]
    $region33: #{tpu_custom_call.1} parent=1 // pred_fallthru
      _
    // Predicated region
    $region34: #{tpu_custom_call.1} parent=1 // pred_check
      _
    $region35: #{tpu_custom_call.1} parent=1 // pred_check_branch
      %162 = sbr.rel (0) target = $region37
    $region36: #{tpu_custom_call.1} parent=1 // pred_region
      %163 = dma.done [#allocation4], 128
    $region37: #{tpu_custom_call.1} parent=1 // pred_fallthru
      _
    %164 = vsyncpa [#allocation3], 1
    %165 = vsyncpa [#allocation6], 1
    %166 = vsyncpa [#allocation4], 1

</llo_original>
